<compile_context>
chip_gen: v6e
topology: v6e:2x2x1
jax: 0.10.0
libtpu: 0.0.40
codegen_flags: <defaults>
</compile_context>

<pallas_src>
import jax
import jax.numpy as jnp
from jax.experimental import pallas as pl
from jax.experimental.pallas import tpu as pltpu


def _round_up(x, m):
    return ((x + m - 1) // m) * m


def pointpillars_scatter(voxel_features, coords, *, batch_size, nx, ny, tile=256):
    """Pallas equivalent of PointPillarsScatter.forward.

    voxel_features: (P, C) float32 pillar features.
    coords:         (P, 4) int; for batch_size > 1 the module uses
                    x = coords[:,1], y = coords[:,2], batch = coords[:,3];
                    for batch_size == 1 it uses x = coords[:,0], y = coords[:,1].
    Returns (batch_size, C, nx, ny), matching the PyTorch output layout.
    """
    P, C = voxel_features.shape
    L = nx * ny

    # ---- flat scatter index per pillar:  b*L + x*ny + y ---------------------
    coords = coords.astype(jnp.int32)
    if batch_size > 1:
        b_idx = coords[:, 3]
        sp_idx = coords[:, 1] * ny + coords[:, 2]
    else:
        b_idx = jnp.zeros((P,), jnp.int32)
        sp_idx = coords[:, 0] * ny + coords[:, 1]
    flat_idx = b_idx * L + sp_idx                                    # (P,)

    # ---- pad only the (small) pillar axis to a lane multiple ----------------
    P_pad = _round_up(max(P, 1), 128)
    if P_pad != P:
        flat_idx = jnp.pad(flat_idx, (0, P_pad - P), constant_values=-1)
        voxel_features = jnp.pad(voxel_features, ((0, P_pad - P), (0, 0)))
    idx2d = flat_idx.reshape(P_pad, 1)      # pillars on sublanes, 1 lane
    voxT = voxel_features.T                 # (C, P_pad): MXU lhs, channel-major

    # ---- canvas tiling over the lane axis ------------------------------------
    assert tile % 128 == 0, "tile must be a multiple of 128 lanes"
    tile = min(tile, _round_up(L, 128))
    num_tiles = pl.cdiv(L, tile)
    out_dtype = voxel_features.dtype

    def _kernel(idx_ref, voxT_ref, o_ref):
        b = pl.program_id(0)
        t = pl.program_id(1)
        # Target flat index for each of this block's `tile` output lanes.
        local = jax.lax.broadcasted_iota(jnp.int32, (1, tile), 1) + t * tile
        target = local + b * L                                       # (1, tile)
        idx = idx_ref[...]                                           # (P_pad, 1)
        # One-hot scatter matrix: onehot[p, l] == 1  iff pillar p lands in lane l.
        # TODO(synk): duplicate pillar coords sum here instead of last-write-wins;
        # PointPillars coords are unique per batch element so results are identical.
        onehot = ((idx == target) & (local < L)).astype(voxT_ref.dtype)
        acc = jnp.dot(voxT_ref[...], onehot,
                      preferred_element_type=jnp.float32)            # (C, tile)
        o_ref[...] = acc[None].astype(o_ref.dtype)

    flops = 2 * batch_size * num_tiles * C * P_pad * tile
    bytes_accessed = int(voxT.size * voxT.dtype.itemsize
                         + idx2d.size * 4
                         + batch_size * C * L * jnp.dtype(out_dtype).itemsize)

    out = pl.pallas_call(
        _kernel,
        out_shape=jax.ShapeDtypeStruct((batch_size, C, L), out_dtype),
        grid_spec=pltpu.PrefetchScalarGridSpec(
            num_scalar_prefetch=0,
            grid=(batch_size, num_tiles),
            in_specs=[
                # Full-array blocks with constant index maps -> DMA'd once,
                # resident in VMEM for every grid step.
                pl.BlockSpec((P_pad, 1), lambda b, t: (0, 0)),
                pl.BlockSpec((C, P_pad), lambda b, t: (0, 0)),
            ],
            out_specs=pl.BlockSpec((1, C, tile), lambda b, t: (b, 0, t)),
        ),
        compiler_params=pltpu.CompilerParams(
            dimension_semantics=("parallel", "parallel")),
        cost_estimate=pl.CostEstimate(flops=flops, transcendentals=0,
                                      bytes_accessed=bytes_accessed),
    )(idx2d, voxT)

    # (B, C, nx*ny) -> (B, C, nx, ny): pure reshape, no data movement.
    return out.reshape(batch_size, C, nx, ny)


def _reference(voxel_features, coords, *, batch_size, nx, ny):
    """Pure-JAX reference mimicking the PyTorch forward exactly."""
    P, C = voxel_features.shape
    L = nx * ny
    coords = coords.astype(jnp.int32)
    canvas = jnp.zeros((batch_size, C, L), voxel_features.dtype)
    if batch_size > 1:
        b_idx = coords[:, 3]
        sp_idx = coords[:, 1] * ny + coords[:, 2]
    else:
        b_idx = jnp.zeros((P,), jnp.int32)
        sp_idx = coords[:, 0] * ny + coords[:, 1]
    canvas = canvas.at[b_idx, :, sp_idx].set(voxel_features)
    return canvas.reshape(batch_size, C, nx, ny)


if __name__ == "__main__":
    key = jax.random.PRNGKey(0)
    k_cells0, k_cells1, k_feat = jax.random.split(key, 3)

    # Small shapes consistent with the module (num_input_features default = 64).
    B, C, nx, ny = 2, 64, 16, 16
    P_per_batch = 100
    L = nx * ny

    # Unique occupied (x, y) cells per batch element, as PointPillars guarantees.
    cells0 = jax.random.permutation(k_cells0, L)[:P_per_batch]
    cells1 = jax.random.permutation(k_cells1, L)[:P_per_batch]
    cells = jnp.concatenate([cells0, cells1]).astype(jnp.int32)
    xs = cells // ny
    ys = cells % ny
    bs = jnp.concatenate([jnp.zeros((P_per_batch,), jnp.int32),
                          jnp.ones((P_per_batch,), jnp.int32)])
    # coords layout used by the module when batch_size > 1: (_, x, y, batch)
    coords = jnp.stack([jnp.zeros_like(xs), xs, ys, bs], axis=1)
    voxel_features = jax.random.normal(k_feat, (2 * P_per_batch, C), jnp.float32)

    out = pointpillars_scatter(voxel_features, coords,
                               batch_size=B, nx=nx, ny=ny, tile=256)
    jax.block_until_ready(out)

    ref = _reference(voxel_features, coords, batch_size=B, nx=nx, ny=ny)
    assert out.shape == (B, C, nx, ny)
    assert jnp.allclose(out, ref, atol=1e-5), float(jnp.abs(out - ref).max())

    print("KERNEL_OK")
</pallas_src>

<mosaic_0001>
module attributes {stable_mosaic.version = 11 : i64} {
  func.func @_kernel(%arg0: i32, %arg1: i32, %arg2: memref<256x1xi32, #tpu.memory_space<vmem>>, %arg3: memref<64x256xf32, #tpu.memory_space<vmem>>, %arg4: memref<1x64x256xf32, #tpu.memory_space<vmem>>) attributes {dimension_semantics = [#tpu.dimension_semantics<parallel>, #tpu.dimension_semantics<parallel>], iteration_bounds = array<i64: 2, 1>, scalar_prefetch = 0 : i64, scratch_operands = 0 : i64, tpu.core_type = #tpu.core_type<tc>, window_params = [{pipeline_mode = #tpu.pipeline_mode<synchronous>, transform_indices = @transform_0, window_bounds = array<i64: 256, 1>}, {pipeline_mode = #tpu.pipeline_mode<synchronous>, transform_indices = @transform_1, window_bounds = array<i64: 64, 256>}, {transform_indices = @transform_2, window_bounds = array<i64: 1, 64, 256>}]} {
    %0 = tpu.iota {dimensions = array<i32: 1>} : vector<1x256xi32>
    %c256_i32 = arith.constant 256 : i32
    %1 = arith.muli %arg1, %c256_i32 : i32
    %2 = vector.broadcast %1 : i32 to vector<1x256xi32>
    %3 = arith.addi %0, %2 : vector<1x256xi32>
    %c256_i32_0 = arith.constant 256 : i32
    %4 = arith.muli %arg0, %c256_i32_0 : i32
    %5 = vector.broadcast %4 : i32 to vector<1x256xi32>
    %6 = arith.addi %3, %5 : vector<1x256xi32>
    %c0 = arith.constant 0 : index
    %c0_1 = arith.constant 0 : index
    %7 = vector.load %arg2[%c0, %c0_1] : memref<256x1xi32, #tpu.memory_space<vmem>>, vector<256x1xi32>
    %8 = vector.broadcast %7 : vector<256x1xi32> to vector<256x256xi32>
    %9 = vector.broadcast %6 : vector<1x256xi32> to vector<256x256xi32>
    %10 = arith.cmpi eq, %8, %9 : vector<256x256xi32>
    %c256_i32_2 = arith.constant 256 : i32
    %11 = vector.broadcast %c256_i32_2 : i32 to vector<1x256xi32>
    %12 = arith.cmpi slt, %3, %11 : vector<1x256xi32>
    %13 = vector.broadcast %12 : vector<1x256xi1> to vector<256x256xi1>
    %14 = arith.andi %10, %13 : vector<256x256xi1>
    %15 = arith.extui %14 : vector<256x256xi1> to vector<256x256xi32>
    %16 = arith.sitofp %15 : vector<256x256xi32> to vector<256x256xf32>
    %c0_3 = arith.constant 0 : index
    %c0_4 = arith.constant 0 : index
    %17 = vector.load %arg3[%c0_3, %c0_4] : memref<64x256xf32, #tpu.memory_space<vmem>>, vector<64x256xf32>
    %cst = arith.constant dense<0.000000e+00> : vector<64x256xf32>
    %18 = tpu.matmul %17, %16, %cst {dimension_numbers = #tpu.dot_dimension_numbers<[1], [0], [0], [1], [0, 0, 1, 1], [], []>} : vector<64x256xf32>, vector<256x256xf32>, vector<64x256xf32> -> vector<64x256xf32>
    %19 = vector.shape_cast %18 : vector<64x256xf32> to vector<1x64x256xf32>
    %c0_5 = arith.constant 0 : index
    %c0_6 = arith.constant 0 : index
    %c0_7 = arith.constant 0 : index
    %20 = vector.load %arg4[%c0_5, %c0_6, %c0_7] : memref<1x64x256xf32, #tpu.memory_space<vmem>>, vector<1x64x256xf32>
    tpu.vector_store %arg4[%c0_5, %c0_6, %c0_7], %19 {strides = array<i32>} : memref<1x64x256xf32, #tpu.memory_space<vmem>>, vector<1x64x256xf32>,
    return
  }
  func.func @transform_0(%arg0: i32, %arg1: i32) -> (i32, i32) {
    %c0_i32 = arith.constant 0 : i32
    %c0_i32_0 = arith.constant 0 : i32
    %c0_i32_1 = arith.constant 0 : i32
    return %c0_i32, %c0_i32_0 : i32, i32
  }
  func.func @transform_1(%arg0: i32, %arg1: i32) -> (i32, i32) {
    %c0_i32 = arith.constant 0 : i32
    %c0_i32_0 = arith.constant 0 : i32
    %c0_i32_1 = arith.constant 0 : i32
    return %c0_i32, %c0_i32_0 : i32, i32
  }
  func.func @transform_2(%arg0: i32, %arg1: i32) -> (i32, i32, i32) {
    %c0_i32 = arith.constant 0 : i32
    %c0_i32_0 = arith.constant 0 : i32
    return %arg0, %c0_i32, %arg1 : i32, i32, i32
  }
}

</mosaic_0001>

<llo_original>
// kernel: tpu_custom_call.1
$region0: #{tpu_custom_call.1}
  #allocation0 [shape = 'u32[]', space=smem, size = 0x4, offset = 0x4, fixed_abs, tag = 'smem constant byte address 0x4 - core index']
  #allocation1 [shape = 'u32[144,128]{1,0:T(1,128)}', space=vmem, size = 0x12000, scoped, tag = 'internal scratch']
  %s0 = inlined_call_operand.vmem [shape: s32[256,1], index: 0, kind: input, shape index: {}]
  %s1 = inlined_call_operand.vmem [shape: f32[64,256], index: 1, kind: input, shape index: {}]
  %s2 = inlined_call_operand.hbm [shape: f32[2,64,256], index: 2, kind: output, shape index: {}]
  %s3 = sld [smem:[#allocation0]]
  $region41: #{tpu_custom_call.1} parent=0
    _
  %s5 = ssub.s32 1, %s3
  %s6 = scalar_select 0, %s5, %s3
  $region1: #{tpu_custom_call.1} parent=0
    #allocation2 [shape = 'u8[131072]{0}', space=vmem, size = 0x20000, scoped, tag = 'output window, operand 0']
    #allocation3 [shape = 's32[2]{0}', space=sflag, size = 0x8, scoped, tag = 'scoped memory for tpu_custom_call.1']
    %7 = vsyncpa [#allocation3], 0
    %s8 = scalar_lea.sflag [#allocation3], 1
    %9 = vsyncpa %s8, 0
    loop: start=0, step=1, limit=4
    $region2: #{tpu_custom_call.1} parent=1 // loop_pre_header
      _
    $region3: #{tpu_custom_call.1} parent=1 // loop_header
      %s11 = sphi 0, %s15
      %p12 = scmp.ge.s32.totalorder %s11, 4
      %s18 = sphi 0, %s30
      %s19 = sphi 0, %s26
      %s20 = sphi 0, %s18
      %s21 = sphi 0, %s19
      %s22 = sphi 0, %s20
      %s23 = sphi 0, %s21
      %s31 = sphi 0, %s31
      %s33 = sphi 0, %s31
      %s34 = sphi 0, %s33
      %s48 = sphi 0, %s34
      %s52 = sphi 0, %s52
      %s54 = sphi 0, %s52
      %s55 = sphi 0, %s54
      %s69 = sphi 0, %s55
      %s77 = sphi 0, %s79
      %s80 = sphi 0, %s77
      %s81 = sphi 0, %s80
      %s97 = sphi 0, %s81
    $region4: #{tpu_custom_call.1} parent=1 // loop_header_branch
      %14 = sbr.rel (%p12) target = $region8
    $region5: #{tpu_custom_call.1} parent=1 // loop_body
      %s16 = ssub.s32 %s11, 1
      %s17 = ssub.s32 %s11, 2
      %s24 = sadd.s32 1, %s19
      %p25 = scmp.ge.s32.totalorder %s24, 1
      %s26 = scalar_select %p25, 0, %s24
      %s27 = sadd.s32 1, %s18
      %s28 = scalar_select %p25, %s27, %s18
      %p29 = scmp.ge.s32.totalorder %s28, 2
      %s30 = scalar_select %p29, 0, %s28
      %s32 = sadd.s32 %s31, 1
      %p35 = scmp.eq.s32.totalorder %s11, 1
      %p36 = scmp.ne.s32.totalorder %s31, %s33
      %p37 = scmp.eq.s32.totalorder %s11, 0
      %p38 = por %p36, %p37
      %p39 = scmp.ne.s32.totalorder %s31, %s33
      %p40 = scmp.eq.s32.totalorder %s16, 1
      %p41 = por %p39, %p40
      %p42 = scmp.ne.s32.totalorder %s33, %s34
      %p43 = scmp.eq.s32.totalorder %s16, 0
      %p44 = por %p42, %p43
      %p45 = scmp.ne.s32.totalorder %s33, %s34
      %p46 = scmp.eq.s32.totalorder %s17, 1
      %p47 = por %p45, %p46
      %p49 = scmp.ne.s32.totalorder %s34, %s48
      %p50 = scmp.eq.s32.totalorder %s17, 0
      %p51 = por %p49, %p50
      %s53 = sadd.s32 %s52, 1
      %p56 = scmp.eq.s32.totalorder %s11, 1
      %p57 = scmp.ne.s32.totalorder %s52, %s54
      %p58 = scmp.eq.s32.totalorder %s11, 0
      %p59 = por %p57, %p58
      %p60 = scmp.ne.s32.totalorder %s52, %s54
      %p61 = scmp.eq.s32.totalorder %s16, 1
      %p62 = por %p60, %p61
      %p63 = scmp.ne.s32.totalorder %s54, %s55
      %p64 = scmp.eq.s32.totalorder %s16, 0
      %p65 = por %p63, %p64
      %p66 = scmp.ne.s32.totalorder %s54, %s55
      %p67 = scmp.eq.s32.totalorder %s17, 1
      %p68 = por %p66, %p67
      %p70 = scmp.ne.s32.totalorder %s55, %s69
      %p71 = scmp.eq.s32.totalorder %s17, 0
      %p72 = por %p70, %p71
      %s73 = ssub.s32 %s18, %s30
      %s74 = ssub.s32 %s19, %s26
      %s75 = sor.u32 %s73, %s74
      %p76 = scmp.eq.s32.totalorder %s75, 0
      %s78 = sadd.s32 %s77, 1
      %s79 = scalar_select %p76, %s77, %s78
      %p82 = pneg %p76
      %p83 = scmp.eq.s32.totalorder %s11, 1
      %p84 = por %p82, %p83
      %p85 = scmp.ne.s32.totalorder %s77, %s80
      %p86 = scmp.eq.s32.totalorder %s11, 0
      %p87 = por %p85, %p86
      %p88 = scmp.ne.s32.totalorder %s77, %s80
      %p89 = scmp.eq.s32.totalorder %s16, 1
      %p90 = por %p88, %p89
      %p91 = scmp.ne.s32.totalorder %s80, %s81
      %p92 = scmp.eq.s32.totalorder %s16, 0
      %p93 = por %p91, %p92
      %p94 = scmp.ne.s32.totalorder %s80, %s81
      %p95 = scmp.eq.s32.totalorder %s17, 1
      %p96 = por %p94, %p95
      %p98 = scmp.ne.s32.totalorder %s81, %s97
      %p99 = scmp.eq.s32.totalorder %s17, 0
      %p100 = por %p98, %p99
      %p101 = scmp.le.s32.totalorder 1, %s11
      %p102 = scmp.lt.s32.totalorder %s11, 3
      %p103 = pnand %p101, %p102
      %p104 = pneg %p103
      // Predicated region
      $region9: #{tpu_custom_call.1} parent=5 // pred_check
        _
      $region10: #{tpu_custom_call.1} parent=5 // pred_check_branch
        %106 = sbr.rel (%p103) target = $region12
      $region11: #{tpu_custom_call.1} parent=5 // pred_region
        %s107 = ssub.s32 %s11, 1
        // Predicated region
        $region13: #{tpu_custom_call.1} parent=11 // pred_check
          %p108 = pneg %p44
        $region14: #{tpu_custom_call.1} parent=11 // pred_check_branch
          %110 = sbr.rel (%p108) target = $region16
        $region15: #{tpu_custom_call.1} parent=11 // pred_region
          _
        $region16: #{tpu_custom_call.1} parent=11 // pred_fallthru
          _
        // Predicated region
        $region17: #{tpu_custom_call.1} parent=11 // pred_check
          %p111 = pneg %p65
        $region18: #{tpu_custom_call.1} parent=11 // pred_check_branch
          %113 = sbr.rel (%p111) target = $region20
        $region19: #{tpu_custom_call.1} parent=11 // pred_region
          _
        $region20: #{tpu_custom_call.1} parent=11 // pred_fallthru
          _
      $region12: #{tpu_custom_call.1} parent=5 // pred_fallthru
        _
      %p114 = scmp.lt.s32.totalorder %s11, 2
      // Predicated region
      $region21: #{tpu_custom_call.1} parent=5 // pred_check
        %p115 = pneg %p114
      $region22: #{tpu_custom_call.1} parent=5 // pred_check_branch
        %117 = sbr.rel (%p115) target = $region24
      $region23: #{tpu_custom_call.1} parent=5 // pred_region
        _
      $region24: #{tpu_custom_call.1} parent=5 // pred_fallthru
        _
      %p118 = scmp.le.s32.totalorder 1, %s11
      %p119 = scmp.lt.s32.totalorder %s11, 3
      %p120 = pnand %p118, %p119
      %p121 = pneg %p120
      // Predicated region
      $region25: #{tpu_custom_call.1} parent=5 // pred_check
        _
      $region26: #{tpu_custom_call.1} parent=5 // pred_check_branch
        %123 = sbr.rel (%p120) target = $region28
      $region27: #{tpu_custom_call.1} parent=5 // pred_region
        %s124 = ssub.s32 %s11, 1
        %p125 = pneg %p44
        %p126 = pneg %p41
        %p127 = pneg %p65
        %p128 = pneg %p62
        %p129 = pneg %p93
        %p130 = pneg %p90
        %s131 = sand.u32 %s80, 1
        %s132 = scalar_lea.sflag [#allocation3], %s131
        %s133 = sand.u32 %s80, 1
        %s134 = smul.addr %s133, 128
        %s135 = scalar_lea.vmem [#allocation2], %s134
        %s136 = smul.u32 2, %s21
        %v137 = vlaneseq
        %v138 = vand.u32 %v137, 127
        %v139 = vadd.s32 %v138, 128
        %s140 = smul.u32 %s21, 256
        %v141 = vstv %s140
        %v142 = vadd.s32 %v138, %v141
        %v143 = vadd.s32 %v139, %v141
        %s144 = smul.u32 %s20, 256
        %v145 = vstv %s144
        %v146 = vadd.s32 %v142, %v145
        %v147 = vadd.s32 %v143, %v145
        %v148 = vld [vmem:[%s0] sm:$0xff]
        %v149 = vld [vmem:[%s0 + $0x8] sm:$0xff]
        %v150 = vld [vmem:[%s0 + $0x10] sm:$0xff]
        %v151 = vld [vmem:[%s0 + $0x18] sm:$0xff]
        %v152 = vld [vmem:[%s0 + $0x20] sm:$0xff]
        %v153 = vld [vmem:[%s0 + $0x28] sm:$0xff]
        %v154 = vld [vmem:[%s0 + $0x30] sm:$0xff]
        %v155 = vld [vmem:[%s0 + $0x38] sm:$0xff]
        %v156 = vld [vmem:[%s0 + $0x40] sm:$0xff]
        %v157 = vld [vmem:[%s0 + $0x48] sm:$0xff]
        %v158 = vld [vmem:[%s0 + $0x50] sm:$0xff]
        %v159 = vld [vmem:[%s0 + $0x58] sm:$0xff]
        %v160 = vld [vmem:[%s0 + $0x60] sm:$0xff]
        %v161 = vld [vmem:[%s0 + $0x68] sm:$0xff]
        %v162 = vld [vmem:[%s0 + $0x70] sm:$0xff]
        %v163 = vld [vmem:[%s0 + $0x78] sm:$0xff]
        %v164 = vld [vmem:[%s0 + $0x80] sm:$0xff]
        %v165 = vld [vmem:[%s0 + $0x88] sm:$0xff]
        %v166 = vld [vmem:[%s0 + $0x90] sm:$0xff]
        %v167 = vld [vmem:[%s0 + $0x98] sm:$0xff]
        %v168 = vld [vmem:[%s0 + $0xa0] sm:$0xff]
        %v169 = vld [vmem:[%s0 + $0xa8] sm:$0xff]
        %v170 = vld [vmem:[%s0 + $0xb0] sm:$0xff]
        %v171 = vld [vmem:[%s0 + $0xb8] sm:$0xff]
        %v172 = vld [vmem:[%s0 + $0xc0] sm:$0xff]
        %v173 = vld [vmem:[%s0 + $0xc8] sm:$0xff]
        %v174 = vld [vmem:[%s0 + $0xd0] sm:$0xff]
        %v175 = vld [vmem:[%s0 + $0xd8] sm:$0xff]
        %v176 = vld [vmem:[%s0 + $0xe0] sm:$0xff]
        %v177 = vld [vmem:[%s0 + $0xe8] sm:$0xff]
        %v178 = vld [vmem:[%s0 + $0xf0] sm:$0xff]
        %v179 = vld [vmem:[%s0 + $0xf8] sm:$0xff]
        %180 = vset.pattern.permute.xlu0 0
        %181 = vperm.xlu0 %180, %v148
        %v182 = vpop.permute.xlu0 %181
        %183 = vset.pattern.permute.xlu0 0
        %184 = vperm.xlu0 %183, %v149
        %v185 = vpop.permute.xlu0 %184
        %186 = vset.pattern.permute.xlu0 0
        %187 = vperm.xlu0 %186, %v150
        %v188 = vpop.permute.xlu0 %187
        %189 = vset.pattern.permute.xlu0 0
        %190 = vperm.xlu0 %189, %v151
        %v191 = vpop.permute.xlu0 %190
        %192 = vset.pattern.permute.xlu0 0
        %193 = vperm.xlu0 %192, %v152
        %v194 = vpop.permute.xlu0 %193
        %195 = vset.pattern.permute.xlu0 0
        %196 = vperm.xlu0 %195, %v153
        %v197 = vpop.permute.xlu0 %196
        %198 = vset.pattern.permute.xlu0 0
        %199 = vperm.xlu0 %198, %v154
        %v200 = vpop.permute.xlu0 %199
        %201 = vset.pattern.permute.xlu0 0
        %202 = vperm.xlu0 %201, %v155
        %v203 = vpop.permute.xlu0 %202
        %204 = vset.pattern.permute.xlu0 0
        %205 = vperm.xlu0 %204, %v156
        %v206 = vpop.permute.xlu0 %205
        %207 = vset.pattern.permute.xlu0 0
        %208 = vperm.xlu0 %207, %v157
        %v209 = vpop.permute.xlu0 %208
        %210 = vset.pattern.permute.xlu0 0
        %211 = vperm.xlu0 %210, %v158
        %v212 = vpop.permute.xlu0 %211
        %213 = vset.pattern.permute.xlu0 0
        %214 = vperm.xlu0 %213, %v159
        %v215 = vpop.permute.xlu0 %214
        %216 = vset.pattern.permute.xlu0 0
        %217 = vperm.xlu0 %216, %v160
        %v218 = vpop.permute.xlu0 %217
        %219 = vset.pattern.permute.xlu0 0
        %220 = vperm.xlu0 %219, %v161
        %v221 = vpop.permute.xlu0 %220
        %222 = vset.pattern.permute.xlu0 0
        %223 = vperm.xlu0 %222, %v162
        %v224 = vpop.permute.xlu0 %223
        %225 = vset.pattern.permute.xlu0 0
        %226 = vperm.xlu0 %225, %v163
        %v227 = vpop.permute.xlu0 %226
        %228 = vset.pattern.permute.xlu0 0
        %229 = vperm.xlu0 %228, %v164
        %v230 = vpop.permute.xlu0 %229
        %231 = vset.pattern.permute.xlu0 0
        %232 = vperm.xlu0 %231, %v165
        %v233 = vpop.permute.xlu0 %232
        %234 = vset.pattern.permute.xlu0 0
        %235 = vperm.xlu0 %234, %v166
        %v236 = vpop.permute.xlu0 %235
        %237 = vset.pattern.permute.xlu0 0
        %238 = vperm.xlu0 %237, %v167
        %v239 = vpop.permute.xlu0 %238
        %240 = vset.pattern.permute.xlu0 0
        %241 = vperm.xlu0 %240, %v168
        %v242 = vpop.permute.xlu0 %241
        %243 = vset.pattern.permute.xlu0 0
        %244 = vperm.xlu0 %243, %v169
        %v245 = vpop.permute.xlu0 %244
        %246 = vset.pattern.permute.xlu0 0
        %247 = vperm.xlu0 %246, %v170
        %v248 = vpop.permute.xlu0 %247
        %249 = vset.pattern.permute.xlu0 0
        %250 = vperm.xlu0 %249, %v171
        %v251 = vpop.permute.xlu0 %250
        %252 = vset.pattern.permute.xlu0 0
        %253 = vperm.xlu0 %252, %v172
        %v254 = vpop.permute.xlu0 %253
        %255 = vset.pattern.permute.xlu0 0
        %256 = vperm.xlu0 %255, %v173
        %v257 = vpop.permute.xlu0 %256
        %258 = vset.pattern.permute.xlu0 0
        %259 = vperm.xlu0 %258, %v174
        %v260 = vpop.permute.xlu0 %259
        %261 = vset.pattern.permute.xlu0 0
        %262 = vperm.xlu0 %261, %v175
        %v263 = vpop.permute.xlu0 %262
        %264 = vset.pattern.permute.xlu0 0
        %265 = vperm.xlu0 %264, %v176
        %v266 = vpop.permute.xlu0 %265
        %267 = vset.pattern.permute.xlu0 0
        %268 = vperm.xlu0 %267, %v177
        %v269 = vpop.permute.xlu0 %268
        %270 = vset.pattern.permute.xlu0 0
        %271 = vperm.xlu0 %270, %v178
        %v272 = vpop.permute.xlu0 %271
        %273 = vset.pattern.permute.xlu0 0
        %274 = vperm.xlu0 %273, %v179
        %v275 = vpop.permute.xlu0 %274
        %vm276 = vcmp.eq.s32.totalorder %v182, %v146
        %vm277 = vcmp.eq.s32.totalorder %v182, %v147
        %vm278 = vcmp.eq.s32.totalorder %v185, %v146
        %vm279 = vcmp.eq.s32.totalorder %v185, %v147
        %vm280 = vcmp.eq.s32.totalorder %v188, %v146
        %vm281 = vcmp.eq.s32.totalorder %v188, %v147
        %vm282 = vcmp.eq.s32.totalorder %v191, %v146
        %vm283 = vcmp.eq.s32.totalorder %v191, %v147
        %vm284 = vcmp.eq.s32.totalorder %v194, %v146
        %vm285 = vcmp.eq.s32.totalorder %v194, %v147
        %vm286 = vcmp.eq.s32.totalorder %v197, %v146
        %vm287 = vcmp.eq.s32.totalorder %v197, %v147
        %vm288 = vcmp.eq.s32.totalorder %v200, %v146
        %vm289 = vcmp.eq.s32.totalorder %v200, %v147
        %vm290 = vcmp.eq.s32.totalorder %v203, %v146
        %vm291 = vcmp.eq.s32.totalorder %v203, %v147
        %vm292 = vcmp.eq.s32.totalorder %v206, %v146
        %vm293 = vcmp.eq.s32.totalorder %v206, %v147
        %vm294 = vcmp.eq.s32.totalorder %v209, %v146
        %vm295 = vcmp.eq.s32.totalorder %v209, %v147
        %vm296 = vcmp.eq.s32.totalorder %v212, %v146
        %vm297 = vcmp.eq.s32.totalorder %v212, %v147
        %vm298 = vcmp.eq.s32.totalorder %v215, %v146
        %vm299 = vcmp.eq.s32.totalorder %v215, %v147
        %vm300 = vcmp.eq.s32.totalorder %v218, %v146
        %vm301 = vcmp.eq.s32.totalorder %v218, %v147
        %vm302 = vcmp.eq.s32.totalorder %v221, %v146
        %vm303 = vcmp.eq.s32.totalorder %v221, %v147
        %vm304 = vcmp.eq.s32.totalorder %v224, %v146
        %vm305 = vcmp.eq.s32.totalorder %v224, %v147
        %vm306 = vcmp.eq.s32.totalorder %v227, %v146
        %vm307 = vcmp.eq.s32.totalorder %v227, %v147
        %vm308 = vcmp.eq.s32.totalorder %v230, %v146
        %vm309 = vcmp.eq.s32.totalorder %v230, %v147
        %vm310 = vcmp.eq.s32.totalorder %v233, %v146
        %vm311 = vcmp.eq.s32.totalorder %v233, %v147
        %vm312 = vcmp.eq.s32.totalorder %v236, %v146
        %vm313 = vcmp.eq.s32.totalorder %v236, %v147
        %vm314 = vcmp.eq.s32.totalorder %v239, %v146
        %vm315 = vcmp.eq.s32.totalorder %v239, %v147
        %vm316 = vcmp.eq.s32.totalorder %v242, %v146
        %vm317 = vcmp.eq.s32.totalorder %v242, %v147
        %vm318 = vcmp.eq.s32.totalorder %v245, %v146
        %vm319 = vcmp.eq.s32.totalorder %v245, %v147
        %vm320 = vcmp.eq.s32.totalorder %v248, %v146
        %vm321 = vcmp.eq.s32.totalorder %v248, %v147
        %vm322 = vcmp.eq.s32.totalorder %v251, %v146
        %vm323 = vcmp.eq.s32.totalorder %v251, %v147
        %vm324 = vcmp.eq.s32.totalorder %v254, %v146
        %vm325 = vcmp.eq.s32.totalorder %v254, %v147
        %vm326 = vcmp.eq.s32.totalorder %v257, %v146
        %vm327 = vcmp.eq.s32.totalorder %v257, %v147
        %vm328 = vcmp.eq.s32.totalorder %v260, %v146
        %vm329 = vcmp.eq.s32.totalorder %v260, %v147
        %vm330 = vcmp.eq.s32.totalorder %v263, %v146
        %vm331 = vcmp.eq.s32.totalorder %v263, %v147
        %vm332 = vcmp.eq.s32.totalorder %v266, %v146
        %vm333 = vcmp.eq.s32.totalorder %v266, %v147
        %vm334 = vcmp.eq.s32.totalorder %v269, %v146
        %vm335 = vcmp.eq.s32.totalorder %v269, %v147
        %vm336 = vcmp.eq.s32.totalorder %v272, %v146
        %vm337 = vcmp.eq.s32.totalorder %v272, %v147
        %vm338 = vcmp.eq.s32.totalorder %v275, %v146
        %vm339 = vcmp.eq.s32.totalorder %v275, %v147
        %vm340 = vcmp.lt.s32.totalorder %v142, 256
        %vm341 = vcmp.lt.s32.totalorder %v143, 256
        %v342 = vsel %vm340, 1, 0
        %v343 = vsel %vm341, 1, 0
        %vm344 = vcmp.eq.s32.totalorder %v342, 1
        %vm345 = vcmp.eq.s32.totalorder %v343, 1
        %vm346 = vmand %vm276, %vm344
        %vm347 = vmand %vm277, %vm345
        %vm348 = vmand %vm278, %vm344
        %vm349 = vmand %vm279, %vm345
        %vm350 = vmand %vm280, %vm344
        %vm351 = vmand %vm281, %vm345
        %vm352 = vmand %vm282, %vm344
        %vm353 = vmand %vm283, %vm345
        %vm354 = vmand %vm284, %vm344
        %vm355 = vmand %vm285, %vm345
        %vm356 = vmand %vm286, %vm344
        %vm357 = vmand %vm287, %vm345
        %vm358 = vmand %vm288, %vm344
        %vm359 = vmand %vm289, %vm345
        %vm360 = vmand %vm290, %vm344
        %vm361 = vmand %vm291, %vm345
        %vm362 = vmand %vm292, %vm344
        %vm363 = vmand %vm293, %vm345
        %vm364 = vmand %vm294, %vm344
        %vm365 = vmand %vm295, %vm345
        %vm366 = vmand %vm296, %vm344
        %vm367 = vmand %vm297, %vm345
        %vm368 = vmand %vm298, %vm344
        %vm369 = vmand %vm299, %vm345
        %vm370 = vmand %vm300, %vm344
        %vm371 = vmand %vm301, %vm345
        %vm372 = vmand %vm302, %vm344
        %vm373 = vmand %vm303, %vm345
        %vm374 = vmand %vm304, %vm344
        %vm375 = vmand %vm305, %vm345
        %vm376 = vmand %vm306, %vm344
        %vm377 = vmand %vm307, %vm345
        %vm378 = vmand %vm308, %vm344
        %vm379 = vmand %vm309, %vm345
        %vm380 = vmand %vm310, %vm344
        %vm381 = vmand %vm311, %vm345
        %vm382 = vmand %vm312, %vm344
        %vm383 = vmand %vm313, %vm345
        %vm384 = vmand %vm314, %vm344
        %vm385 = vmand %vm315, %vm345
        %vm386 = vmand %vm316, %vm344
        %vm387 = vmand %vm317, %vm345
        %vm388 = vmand %vm318, %vm344
        %vm389 = vmand %vm319, %vm345
        %vm390 = vmand %vm320, %vm344
        %vm391 = vmand %vm321, %vm345
        %vm392 = vmand %vm322, %vm344
        %vm393 = vmand %vm323, %vm345
        %vm394 = vmand %vm324, %vm344
        %vm395 = vmand %vm325, %vm345
        %vm396 = vmand %vm326, %vm344
        %vm397 = vmand %vm327, %vm345
        %vm398 = vmand %vm328, %vm344
        %vm399 = vmand %vm329, %vm345
        %vm400 = vmand %vm330, %vm344
        %vm401 = vmand %vm331, %vm345
        %vm402 = vmand %vm332, %vm344
        %vm403 = vmand %vm333, %vm345
        %vm404 = vmand %vm334, %vm344
        %vm405 = vmand %vm335, %vm345
        %vm406 = vmand %vm336, %vm344
        %vm407 = vmand %vm337, %vm345
        %vm408 = vmand %vm338, %vm344
        %vm409 = vmand %vm339, %vm345
        %v410 = vsel %vm346, 1, 0
        %v411 = vsel %vm347, 1, 0
        %v412 = vsel %vm348, 1, 0
        %v413 = vsel %vm349, 1, 0
        %v414 = vsel %vm350, 1, 0
        %v415 = vsel %vm351, 1, 0
        %v416 = vsel %vm352, 1, 0
        %v417 = vsel %vm353, 1, 0
        %v418 = vsel %vm354, 1, 0
        %v419 = vsel %vm355, 1, 0
        %v420 = vsel %vm356, 1, 0
        %v421 = vsel %vm357, 1, 0
        %v422 = vsel %vm358, 1, 0
        %v423 = vsel %vm359, 1, 0
        %v424 = vsel %vm360, 1, 0
        %v425 = vsel %vm361, 1, 0
        %v426 = vsel %vm362, 1, 0
        %v427 = vsel %vm363, 1, 0
        %v428 = vsel %vm364, 1, 0
        %v429 = vsel %vm365, 1, 0
        %v430 = vsel %vm366, 1, 0
        %v431 = vsel %vm367, 1, 0
        %v432 = vsel %vm368, 1, 0
        %v433 = vsel %vm369, 1, 0
        %v434 = vsel %vm370, 1, 0
        %v435 = vsel %vm371, 1, 0
        %v436 = vsel %vm372, 1, 0
        %v437 = vsel %vm373, 1, 0
        %v438 = vsel %vm374, 1, 0
        %v439 = vsel %vm375, 1, 0
        %v440 = vsel %vm376, 1, 0
        %v441 = vsel %vm377, 1, 0
        %v442 = vsel %vm378, 1, 0
        %v443 = vsel %vm379, 1, 0
        %v444 = vsel %vm380, 1, 0
        %v445 = vsel %vm381, 1, 0
        %v446 = vsel %vm382, 1, 0
        %v447 = vsel %vm383, 1, 0
        %v448 = vsel %vm384, 1, 0
        %v449 = vsel %vm385, 1, 0
        %v450 = vsel %vm386, 1, 0
        %v451 = vsel %vm387, 1, 0
        %v452 = vsel %vm388, 1, 0
        %v453 = vsel %vm389, 1, 0
        %v454 = vsel %vm390, 1, 0
        %v455 = vsel %vm391, 1, 0
        %v456 = vsel %vm392, 1, 0
        %v457 = vsel %vm393, 1, 0
        %v458 = vsel %vm394, 1, 0
        %v459 = vsel %vm395, 1, 0
        %v460 = vsel %vm396, 1, 0
        %v461 = vsel %vm397, 1, 0
        %v462 = vsel %vm398, 1, 0
        %v463 = vsel %vm399, 1, 0
        %v464 = vsel %vm400, 1, 0
        %v465 = vsel %vm401, 1, 0
        %v466 = vsel %vm402, 1, 0
        %v467 = vsel %vm403, 1, 0
        %v468 = vsel %vm404, 1, 0
        %v469 = vsel %vm405, 1, 0
        %v470 = vsel %vm406, 1, 0
        %v471 = vsel %vm407, 1, 0
        %v472 = vsel %vm408, 1, 0
        %v473 = vsel %vm409, 1, 0
        %v474 = vcvt.s32.f32 %v410
        %v475 = vcvt.s32.f32 %v411
        %v476 = vcvt.s32.f32 %v412
        %v477 = vcvt.s32.f32 %v413
        %v478 = vcvt.s32.f32 %v414
        %v479 = vcvt.s32.f32 %v415
        %v480 = vcvt.s32.f32 %v416
        %v481 = vcvt.s32.f32 %v417
        %v482 = vcvt.s32.f32 %v418
        %v483 = vcvt.s32.f32 %v419
        %v484 = vcvt.s32.f32 %v420
        %v485 = vcvt.s32.f32 %v421
        %v486 = vcvt.s32.f32 %v422
        %v487 = vcvt.s32.f32 %v423
        %v488 = vcvt.s32.f32 %v424
        %v489 = vcvt.s32.f32 %v425
        %v490 = vcvt.s32.f32 %v426
        %v491 = vcvt.s32.f32 %v427
        %v492 = vcvt.s32.f32 %v428
        %v493 = vcvt.s32.f32 %v429
        %v494 = vcvt.s32.f32 %v430
        %v495 = vcvt.s32.f32 %v431
        %v496 = vcvt.s32.f32 %v432
        %v497 = vcvt.s32.f32 %v433
        %v498 = vcvt.s32.f32 %v434
        %v499 = vcvt.s32.f32 %v435
        %v500 = vcvt.s32.f32 %v436
        %v501 = vcvt.s32.f32 %v437
        %v502 = vcvt.s32.f32 %v438
        %v503 = vcvt.s32.f32 %v439
        %v504 = vcvt.s32.f32 %v440
        %v505 = vcvt.s32.f32 %v441
        %v506 = vcvt.s32.f32 %v442
        %v507 = vcvt.s32.f32 %v443
        %v508 = vcvt.s32.f32 %v444
        %v509 = vcvt.s32.f32 %v445
        %v510 = vcvt.s32.f32 %v446
        %v511 = vcvt.s32.f32 %v447
        %v512 = vcvt.s32.f32 %v448
        %v513 = vcvt.s32.f32 %v449
        %v514 = vcvt.s32.f32 %v450
        %v515 = vcvt.s32.f32 %v451
        %v516 = vcvt.s32.f32 %v452
        %v517 = vcvt.s32.f32 %v453
        %v518 = vcvt.s32.f32 %v454
        %v519 = vcvt.s32.f32 %v455
        %v520 = vcvt.s32.f32 %v456
        %v521 = vcvt.s32.f32 %v457
        %v522 = vcvt.s32.f32 %v458
        %v523 = vcvt.s32.f32 %v459
        %v524 = vcvt.s32.f32 %v460
        %v525 = vcvt.s32.f32 %v461
        %v526 = vcvt.s32.f32 %v462
        %v527 = vcvt.s32.f32 %v463
        %v528 = vcvt.s32.f32 %v464
        %v529 = vcvt.s32.f32 %v465
        %v530 = vcvt.s32.f32 %v466
        %v531 = vcvt.s32.f32 %v467
        %v532 = vcvt.s32.f32 %v468
        %v533 = vcvt.s32.f32 %v469
        %v534 = vcvt.s32.f32 %v470
        %v535 = vcvt.s32.f32 %v471
        %v536 = vcvt.s32.f32 %v472
        %v537 = vcvt.s32.f32 %v473
        %v538 = vld [vmem:[%s1] sm:$0xff]
        %v539 = vld [vmem:[%s1 + $0x8] sm:$0xff]
        %v540 = vld [vmem:[%s1 + $0x10] sm:$0xff]
        %v541 = vld [vmem:[%s1 + $0x18] sm:$0xff]
        %v542 = vld [vmem:[%s1 + $0x20] sm:$0xff]
        %v543 = vld [vmem:[%s1 + $0x28] sm:$0xff]
        %v544 = vld [vmem:[%s1 + $0x30] sm:$0xff]
        %v545 = vld [vmem:[%s1 + $0x38] sm:$0xff]
        %v546 = vld [vmem:[%s1 + $0x40] sm:$0xff]
        %v547 = vld [vmem:[%s1 + $0x48] sm:$0xff]
        %v548 = vld [vmem:[%s1 + $0x50] sm:$0xff]
        %v549 = vld [vmem:[%s1 + $0x58] sm:$0xff]
        %v550 = vld [vmem:[%s1 + $0x60] sm:$0xff]
        %v551 = vld [vmem:[%s1 + $0x68] sm:$0xff]
        %v552 = vld [vmem:[%s1 + $0x70] sm:$0xff]
        %v553 = vld [vmem:[%s1 + $0x78] sm:$0xff]
        %554 = vmatprep.subr.mxu0 %v505
        %555 = vmatpush1.msra.mxu0 %v504
        %556 = vmatprep.subr.mxu0 %v503
        %557 = vmatpush1.msra.mxu0 %v502
        %558 = vmatprep.subr.mxu0 %v501
        %559 = vmatpush1.msra.mxu0 %v500
        %560 = vmatprep.subr.mxu0 %v499
        %561 = vmatpush1.msra.mxu0 %v498
        %562 = vmatprep.subr.mxu0 %v497
        %563 = vmatpush1.msra.mxu0 %v496
        %564 = vmatprep.subr.mxu0 %v495
        %565 = vmatpush1.msra.mxu0 %v494
        %566 = vmatprep.subr.mxu0 %v493
        %567 = vmatpush1.msra.mxu0 %v492
        %568 = vmatprep.subr.mxu0 %v491
        %569 = vmatpush1.msra.mxu0 %v490
        %570 = vmatprep.subr.mxu0 %v489
        %571 = vmatpush1.msra.mxu0 %v488
        %572 = vmatprep.subr.mxu0 %v487
        %573 = vmatpush1.msra.mxu0 %v486
        %574 = vmatprep.subr.mxu0 %v485
        %575 = vmatpush1.msra.mxu0 %v484
        %576 = vmatprep.subr.mxu0 %v483
        %577 = vmatpush1.msra.mxu0 %v482
        %578 = vmatprep.subr.mxu0 %v481
        %579 = vmatpush1.msra.mxu0 %v480
        %580 = vmatprep.subr.mxu0 %v479
        %581 = vmatpush1.msra.mxu0 %v478
        %582 = vmatprep.subr.mxu0 %v477
        %583 = vmatpush1.msra.mxu0 %v476
        %584 = vmatprep.subr.mxu0 %v475
        %585 = vmatpush1.msra.mxu0 %v474
        %586 = vmatprep.subr.mxu0 %v537
        %587 = vmatpush2.msra.mxu0 %v536
        %588 = vmatprep.subr.mxu0 %v535
        %589 = vmatpush2.msra.mxu0 %v534
        %590 = vmatprep.subr.mxu0 %v533
        %591 = vmatpush2.msra.mxu0 %v532
        %592 = vmatprep.subr.mxu0 %v531
        %593 = vmatpush2.msra.mxu0 %v530
        %594 = vmatprep.subr.mxu0 %v529
        %595 = vmatpush2.msra.mxu0 %v528
        %596 = vmatprep.subr.mxu0 %v527
        %597 = vmatpush2.msra.mxu0 %v526
        %598 = vmatprep.subr.mxu0 %v525
        %599 = vmatpush2.msra.mxu0 %v524
        %600 = vmatprep.subr.mxu0 %v523
        %601 = vmatpush2.msra.mxu0 %v522
        %602 = vmatprep.subr.mxu0 %v521
        %603 = vmatpush2.msra.mxu0 %v520
        %604 = vmatprep.subr.mxu0 %v519
        %605 = vmatpush2.msra.mxu0 %v518
        %606 = vmatprep.subr.mxu0 %v517
        %607 = vmatpush2.msra.mxu0 %v516
        %608 = vmatprep.subr.mxu0 %v515
        %609 = vmatpush2.msra.mxu0 %v514
        %610 = vmatprep.subr.mxu0 %v513
        %611 = vmatpush2.msra.mxu0 %v512
        %612 = vmatprep.subr.mxu0 %v511
        %613 = vmatpush2.msra.mxu0 %v510
        %614 = vmatprep.subr.mxu0 %v509
        %615 = vmatpush2.msra.mxu0 %v508
        %616 = vmatprep.subr.mxu0 %v507
        %617 = vmatpush2.msra.mxu0 %v506
        %618 = vmatprep.mubr.f32.mxu0 %v539
        %619 = vmatmul.mubr.f32.gmra.mxu0 %v538
        %v620 = vpop.f32.mrf.mxu0
        %v621 = vadd.f32 0.0, %v620
        %v622 = vpop.f32.mrf.mxu0
        %v623 = vadd.f32 0.0, %v622
        %624 = vmatprep.mubr.f32.mxu0 %v541
        %625 = vmatmul.mubr.f32.gmra.mxu0 %v540
        %v626 = vpop.f32.mrf.mxu0
        %v627 = vadd.f32 0.0, %v626
        %v628 = vpop.f32.mrf.mxu0
        %v629 = vadd.f32 0.0, %v628
        %630 = vmatprep.mubr.f32.mxu0 %v543
        %631 = vmatmul.mubr.f32.gmra.mxu0 %v542
        %v632 = vpop.f32.mrf.mxu0
        %v633 = vadd.f32 0.0, %v632
        %v634 = vpop.f32.mrf.mxu0
        %v635 = vadd.f32 0.0, %v634
        %636 = vmatprep.mubr.f32.mxu0 %v545
        %637 = vmatmul.mubr.f32.gmra.mxu0 %v544
        %v638 = vpop.f32.mrf.mxu0
        %v639 = vadd.f32 0.0, %v638
        %v640 = vpop.f32.mrf.mxu0
        %v641 = vadd.f32 0.0, %v640
        %642 = vmatprep.mubr.f32.mxu0 %v547
        %643 = vmatmul.mubr.f32.gmra.mxu0 %v546
        %v644 = vpop.f32.mrf.mxu0
        %v645 = vadd.f32 0.0, %v644
        %v646 = vpop.f32.mrf.mxu0
        %v647 = vadd.f32 0.0, %v646
        %648 = vmatprep.mubr.f32.mxu0 %v549
        %649 = vmatmul.mubr.f32.gmra.mxu0 %v548
        %v650 = vpop.f32.mrf.mxu0
        %v651 = vadd.f32 0.0, %v650
        %v652 = vpop.f32.mrf.mxu0
        %v653 = vadd.f32 0.0, %v652
        %654 = vmatprep.mubr.f32.mxu0 %v551
        %655 = vmatmul.mubr.f32.gmra.mxu0 %v550
        %v656 = vpop.f32.mrf.mxu0
        %v657 = vadd.f32 0.0, %v656
        %v658 = vpop.f32.mrf.mxu0
        %v659 = vadd.f32 0.0, %v658
        %660 = vmatprep.mubr.f32.mxu0 %v553
        %661 = vmatmul.mubr.f32.gmra.mxu0 %v552
        %v662 = vpop.f32.mrf.mxu0
        %v663 = vadd.f32 0.0, %v662
        %v664 = vpop.f32.mrf.mxu0
        %v665 = vadd.f32 0.0, %v664
        %666 = vdwg.mxu0
        %667 = vst [vmem:[%s135] sm:$0xff] %v621
        %668 = vst [vmem:[%s135 + $0x8] sm:$0xff] %v623
        %669 = vst [vmem:[%s135 + $0x10] sm:$0xff] %v627
        %670 = vst [vmem:[%s135 + $0x18] sm:$0xff] %v629
        %671 = vst [vmem:[%s135 + $0x20] sm:$0xff] %v633
        %672 = vst [vmem:[%s135 + $0x28] sm:$0xff] %v635
        %673 = vst [vmem:[%s135 + $0x30] sm:$0xff] %v639
        %674 = vst [vmem:[%s135 + $0x38] sm:$0xff] %v641
        %675 = vst [vmem:[%s135 + $0x40] sm:$0xff] %v645
        %676 = vst [vmem:[%s135 + $0x48] sm:$0xff] %v647
        %677 = vst [vmem:[%s135 + $0x50] sm:$0xff] %v651
        %678 = vst [vmem:[%s135 + $0x58] sm:$0xff] %v653
        %679 = vst [vmem:[%s135 + $0x60] sm:$0xff] %v657
        %680 = vst [vmem:[%s135 + $0x68] sm:$0xff] %v659
        %681 = vst [vmem:[%s135 + $0x70] sm:$0xff] %v663
        %682 = vst [vmem:[%s135 + $0x78] sm:$0xff] %v665
        %s683 = sand.u32 %s80, 1
        %s684 = scalar_lea.sflag [#allocation3], %s683
        %s685 = sand.u32 %s80, 1
        %s686 = smul.addr %s685, 128
        %s687 = scalar_lea.vmem [#allocation2], %s686
        // Predicated region
        $region29: #{tpu_custom_call.1} parent=27 // pred_check
          %p688 = pneg %p90
        $region30: #{tpu_custom_call.1} parent=27 // pred_check_branch
          %690 = sbr.rel (%p688) target = $region32
        $region31: #{tpu_custom_call.1} parent=27 // pred_region
          %s691 = smul.u32 2, %s21
          %s693 = ssub.s32 2048, 2048
          %694 = vsyncadd %s684, %s693
          %s695 = smul.addr %s20, 16
          %s696 = sadd.s32 %s691, %s695
          %s697 = smul.addr %s696, 128
          %s698 = scalar_lea.hbm %s2, %s697
          %s699 = sshll.u32 %s687, 4
          %s700 = int_to_ptr.vmem [resolvable:$true] %s699
          %705 = dma.vmem_to_hbm [thread:$0]  %s700, 2048, %s698, %s684, 256, 256, 16
        $region32: #{tpu_custom_call.1} parent=27 // pred_fallthru
          _
      $region28: #{tpu_custom_call.1} parent=5 // pred_fallthru
        _
      %p706 = scmp.le.s32.totalorder 2, %s11
      // Predicated region
      $region33: #{tpu_custom_call.1} parent=5 // pred_check
        %p707 = pneg %p706
      $region34: #{tpu_custom_call.1} parent=5 // pred_check_branch
        %709 = sbr.rel (%p707) target = $region36
      $region35: #{tpu_custom_call.1} parent=5 // pred_region
        %s710 = ssub.s32 %s11, 2
        // Predicated region
        $region37: #{tpu_custom_call.1} parent=35 // pred_check
          %p711 = pneg %p96
        $region38: #{tpu_custom_call.1} parent=35 // pred_check_branch
          %713 = sbr.rel (%p711) target = $region40
        $region39: #{tpu_custom_call.1} parent=35 // pred_region
          %s714 = sand.u32 %s81, 1
          %s715 = scalar_lea.sflag [#allocation3], %s714
          %s716 = sand.u32 %s81, 1
          %s717 = smul.addr %s716, 128
          %s718 = scalar_lea.vmem [#allocation2], %s717
          %719 = dma.done %s715, 2048
        $region40: #{tpu_custom_call.1} parent=35 // pred_fallthru
          _
      $region36: #{tpu_custom_call.1} parent=5 // pred_fallthru
        _
    $region6: #{tpu_custom_call.1} parent=1 // loop_footer
      %s15 = sadd.s32 1, %s11
    $region7: #{tpu_custom_call.1} parent=1 // loop_footer_branch
      %10 = sbr.rel target = $region3
    $region8: #{tpu_custom_call.1} parent=1 // loop_exit
      _
    %720 = vsyncpa [#allocation3], 1
    %s721 = scalar_lea.sflag [#allocation3], 1
    %722 = vsyncpa %s721, 1

</llo_original>
